<compile_context>
chip_gen: v7x
topology: tpu7x:2x2x1
jax: 0.10.0
libtpu: 0.0.40
codegen_flags: <defaults>
</compile_context>

<pallas_src>
import functools

import jax
import jax.numpy as jnp
from jax.experimental import pallas as pl
from jax.experimental.pallas import tpu as pltpu


def _sigmoid_range_kernel(x_ref, o_ref, *, low, high):
    x = x_ref[...]
    # Compute in f32 (EUP transcendental + VPU mul/add), cast back on store.
    y = jax.nn.sigmoid(x.astype(jnp.float32)) * (high - low) + low
    o_ref[...] = y.astype(o_ref.dtype)


def _sublane_multiple(dtype):
    # Native sublane packing: f32 -> 8 rows/vreg, bf16 -> 16, int8/fp8 -> 32.
    return max(8, 32 // jnp.dtype(dtype).itemsize)


@functools.lru_cache(maxsize=1)
def _budgets():
    """Per-generation block / scoped-VMEM budgets derived from the chip's VMEM size.

    Returns (target_block_bytes, max_block_bytes, vmem_limit_bytes, min_grid_steps).
    """
    mib = 1024 * 1024
    vmem_cap = 64 * mib  # conservative fallback (v7x-sized)
    try:
        vmem_cap = int(getattr(pltpu.get_tpu_info(), "vmem_capacity_bytes", vmem_cap))
    except Exception:
        pass
    if vmem_cap >= 128 * mib:
        # v5e / v6e: 128 MiB VMEM, 1 TensorCore per chip. 8 MiB blocks amortize the
        # ~0.35 us/step overhead; 2x(in+out) double-buffered stays well under 96 MiB.
        return 8 * mib, 16 * mib, 96 * mib, 1
    # v7x-like: 64 MiB VMEM, 2 TensorCores per chip -> need >=2 grid steps so both
    # cores stream HBM; 8 MiB blocks = 32 MiB double-buffered, under the 48 MiB limit.
    return 8 * mib, 8 * mib, 48 * mib, 2


def sigmoid_range_2d(x, low, high):
    """sigmoid(x) * (high - low) + low for a 2-D array via a tiled Pallas kernel."""
    rows, cols = x.shape
    itemsize = jnp.dtype(x.dtype).itemsize
    sub = _sublane_multiple(x.dtype)
    target, max_block, vmem_limit, min_steps = _budgets()

    kernel = functools.partial(
        _sigmoid_range_kernel, low=float(low), high=float(high)
    )

    n = rows * cols
    cost = pl.CostEstimate(
        flops=5 * n, transcendentals=n, bytes_accessed=2 * n * itemsize
    )

    if cols * itemsize * sub <= max_block or cols < 128:
        # Common case: full-width (lane-dense) blocks, tile rows only, 1-D grid.
        if rows < sub:
            block_rows = rows  # full-extent block (exempt from 8-multiple rule)
        else:
            cand = target // max(1, cols * itemsize)
            cand = (cand // sub) * sub
            block_rows = int(min((rows // sub) * sub, max(sub, cand)))
            if min_steps > 1 and rows > sub:
                # v7x: cap at sublane-aligned cdiv(rows, 2) so the grid has >=2
                # steps and both TensorCores get a share of the HBM streaming.
                half = ((rows + 1) // 2 + sub - 1) // sub * sub
                block_rows = min(block_rows, half)
        grid = (pl.cdiv(rows, block_rows),)
        return pl.pallas_call(
            kernel,
            out_shape=jax.ShapeDtypeStruct((rows, cols), x.dtype),
            grid_spec=pl.GridSpec(
                grid=grid,
                in_specs=[pl.BlockSpec((block_rows, cols), lambda i: (i, 0))],
                out_specs=pl.BlockSpec((block_rows, cols), lambda i: (i, 0)),
            ),
            compiler_params=pltpu.CompilerParams(
                dimension_semantics=("parallel",),
                vmem_limit_bytes=vmem_limit,
            ),
            cost_estimate=cost,
        )(x)

    # Rare case: even a single sublane-group of full-width rows blows the block
    # budget -> also tile columns in multiples of 128 (2-D grid, ragged last block).
    block_rows = sub if rows >= sub else rows
    cand = (target // max(1, block_rows * itemsize * 128)) * 128
    block_cols = int(min((cols // 128) * 128, max(128, cand)))
    grid = (pl.cdiv(rows, block_rows), pl.cdiv(cols, block_cols))
    return pl.pallas_call(
        kernel,
        out_shape=jax.ShapeDtypeStruct((rows, cols), x.dtype),
        grid_spec=pl.GridSpec(
            grid=grid,
            in_specs=[pl.BlockSpec((block_rows, block_cols), lambda i, j: (i, j))],
            out_specs=pl.BlockSpec((block_rows, block_cols), lambda i, j: (i, j)),
        ),
        compiler_params=pltpu.CompilerParams(
            dimension_semantics=("parallel", "parallel"),
            vmem_limit_bytes=vmem_limit,
        ),
        cost_estimate=cost,
    )(x)


class SigmoidRange:
    """JAX/Pallas equivalent of the PyTorch SigmoidRange module."""

    def __init__(self, low, high):
        self.low = float(low)
        self.high = float(high)

    def __call__(self, x):
        x = jnp.asarray(x)
        if not jnp.issubdtype(x.dtype, jnp.floating):
            # torch.sigmoid also rejects integer inputs; casting back would truncate.
            raise TypeError(
                f"SigmoidRange expects a floating-point input, got {x.dtype}"
            )
        if x.ndim == 0:
            # A kernel launch for one element is pure fixed overhead -> plain jnp.
            y = jax.nn.sigmoid(x.astype(jnp.float32)) * (self.high - self.low) + self.low
            return y.astype(x.dtype)
        if x.ndim == 1:
            n = x.shape[0]
            if n % 128 == 0:
                # Free reshape to a lane/sublane-dense (N/128, 128) slab.
                y = sigmoid_range_2d(x.reshape(n // 128, 128), self.low, self.high)
                return y.reshape(n)
            # Ragged length: run as a single-row (1, N) array (lane-tiled, ragged
            # final block). Single HBM pass -- no wrapper-side pad/reshape/slice,
            # each of which would cost an extra full HBM pass.
            return sigmoid_range_2d(x.reshape(1, n), self.low, self.high).reshape(n)
        x2 = x.reshape(-1, x.shape[-1])
        y = sigmoid_range_2d(x2, self.low, self.high)
        return y.reshape(x.shape)


if __name__ == "__main__":
    key = jax.random.PRNGKey(0)
    low, high = -1.0, 3.0
    mod = SigmoidRange(low, high)

    def ref_fn(v):
        return (jax.nn.sigmoid(v.astype(jnp.float32)) * (high - low) + low).astype(v.dtype)

    k0, k1, k2, k3, k4 = jax.random.split(key, 5)

    # Small shape consistent with the module: (batch=2, seq=8, hidden=128).
    x = jax.random.normal(k0, (2, 8, 128), dtype=jnp.float32)
    out = mod(x)
    jax.block_until_ready(out)
    assert out.shape == x.shape and out.dtype == x.dtype
    assert jnp.allclose(out, ref_fn(x), atol=1e-6, rtol=1e-6)

    # Ragged-row path (flattened rows = 21, not a multiple of 8; cols = 96).
    x_rag = jax.random.normal(k1, (3, 7, 96), dtype=jnp.float32)
    out_rag = mod(x_rag)
    jax.block_until_ready(out_rag)
    assert jnp.allclose(out_rag, ref_fn(x_rag), atol=1e-6, rtol=1e-6)

    # 1-D path, length not a multiple of 128 -> single-row (1, N) path, no pad/slice.
    x1d = jax.random.normal(k2, (200,), dtype=jnp.float32)
    out1d = mod(x1d)
    jax.block_until_ready(out1d)
    assert out1d.shape == x1d.shape
    assert jnp.allclose(out1d, ref_fn(x1d), atol=1e-6, rtol=1e-6)

    # 1-D path, multiple of 128 -> free (N/128, 128) slab.
    x1a = jax.random.normal(k3, (256,), dtype=jnp.float32)
    out1a = mod(x1a)
    jax.block_until_ready(out1a)
    assert jnp.allclose(out1a, ref_fn(x1a), atol=1e-6, rtol=1e-6)

    # bf16 path (exercises the dtype-aware sublane multiple of 16).
    x_bf = jax.random.normal(k4, (2, 16, 64), dtype=jnp.bfloat16)
    out_bf = mod(x_bf)
    jax.block_until_ready(out_bf)
    assert out_bf.dtype == jnp.bfloat16
    assert jnp.allclose(
        out_bf.astype(jnp.float32), ref_fn(x_bf).astype(jnp.float32),
        atol=1e-2, rtol=1e-2
    )

    # Scalar path (no kernel launch, plain jnp).
    s_in = jnp.float32(0.3)
    s_out = mod(s_in)
    jax.block_until_ready(s_out)
    assert jnp.allclose(s_out, ref_fn(s_in), atol=1e-6, rtol=1e-6)

    print("KERNEL_OK")
</pallas_src>

<mosaic_0001>
module attributes {stable_mosaic.version = 11 : i64} {
  func.func @_sigmoid_range_kernel(%arg0: i32, %arg1: memref<8x128xf32, #tpu.memory_space<vmem>>, %arg2: memref<8x128xf32, #tpu.memory_space<vmem>>) attributes {dimension_semantics = [#tpu.dimension_semantics<parallel>], iteration_bounds = array<i64: 2>, scalar_prefetch = 0 : i64, scratch_operands = 0 : i64, tpu.core_type = #tpu.core_type<tc>, window_params = [{transform_indices = @transform_0, window_bounds = array<i64: 8, 128>}, {transform_indices = @transform_1, window_bounds = array<i64: 8, 128>}]} {
    %c0 = arith.constant 0 : index
    %c0_0 = arith.constant 0 : index
    %0 = vector.load %arg1[%c0, %c0_0] : memref<8x128xf32, #tpu.memory_space<vmem>>, vector<8x128xf32>
    %1 = arith.negf %0 : vector<8x128xf32>
    %2 = math.exp %1 : vector<8x128xf32>
    %cst = arith.constant 1.000000e+00 : f32
    %3 = vector.broadcast %cst : f32 to vector<8x128xf32>
    %4 = arith.addf %3, %2 : vector<8x128xf32>
    %5 = arith.divf %3, %4 : vector<8x128xf32>
    %cst_1 = arith.constant 4.000000e+00 : f32
    %6 = vector.broadcast %cst_1 : f32 to vector<8x128xf32>
    %7 = arith.mulf %5, %6 : vector<8x128xf32>
    %cst_2 = arith.constant -1.000000e+00 : f32
    %8 = vector.broadcast %cst_2 : f32 to vector<8x128xf32>
    %9 = arith.addf %7, %8 : vector<8x128xf32>
    %c0_3 = arith.constant 0 : index
    %c0_4 = arith.constant 0 : index
    %10 = vector.load %arg2[%c0_3, %c0_4] : memref<8x128xf32, #tpu.memory_space<vmem>>, vector<8x128xf32>
    tpu.vector_store %arg2[%c0_3, %c0_4], %9 {strides = array<i32>} : memref<8x128xf32, #tpu.memory_space<vmem>>, vector<8x128xf32>,
    return
  }
  func.func @transform_0(%arg0: i32) -> (i32, i32) {
    %c0_i32 = arith.constant 0 : i32
    %c0_i32_0 = arith.constant 0 : i32
    return %arg0, %c0_i32 : i32, i32
  }
  func.func @transform_1(%arg0: i32) -> (i32, i32) {
    %c0_i32 = arith.constant 0 : i32
    %c0_i32_0 = arith.constant 0 : i32
    return %arg0, %c0_i32 : i32, i32
  }
}

</mosaic_0001>

<llo_original>
// kernel: tpu_custom_call.1
$region0: #{tpu_custom_call.1}
  #allocation0 [shape = 'u32[]', space=smem, size = 0x4, offset = 0x4, fixed_abs, tag = 'smem constant byte address 0x4 - core index']
  #allocation1 [shape = 'u32[144,128]{1,0:T(1,128)}', space=vmem, size = 0x12000, scoped, tag = 'internal scratch']
  %s0 = inlined_call_operand.hbm [shape: f32[16,128], index: 0, kind: input, shape index: {}]
  %s1 = inlined_call_operand.hbm [shape: f32[16,128], index: 1, kind: output, shape index: {}]
  %s2 = sld [smem:[#allocation0]]
  $region41: #{tpu_custom_call.1} parent=0
    _
  %s4 = ssub.s32 1, %s2
  %s5 = scalar_select 0, %s4, %s2
  $region1: #{tpu_custom_call.1} parent=0
    #allocation2 [shape = 'u8[8192]{0}', space=vmem, size = 0x2000, scoped, tag = 'input window, operand 0']
    #allocation3 [shape = 's32[2]{0}', space=sflag, size = 0x8, scoped, tag = 'scoped memory for tpu_custom_call.1']
    #allocation4 [shape = 's32[2]{0}', space=sflag, size = 0x8, scoped, tag = 'scoped memory for tpu_custom_call.1']
    #allocation5 [shape = 'u8[8192]{0}', space=vmem, size = 0x2000, scoped, tag = 'output window, operand 0']
    %6 = vsyncpa [#allocation3], 0
    %s7 = scalar_lea.sflag [#allocation3], 1
    %8 = vsyncpa %s7, 0
    %9 = vsyncpa [#allocation4], 0
    %s10 = scalar_lea.sflag [#allocation4], 1
    %11 = vsyncpa %s10, 0
    loop: start=0, step=1, limit=4
    $region2: #{tpu_custom_call.1} parent=1 // loop_pre_header
      _
    $region3: #{tpu_custom_call.1} parent=1 // loop_header
      %s13 = sphi 0, %s17
      %p14 = scmp.ge.s32.totalorder %s13, 4
      %s23 = sphi 0, %s25
      %s26 = sphi 0, %s23
      %s27 = sphi 0, %s26
      %s43 = sphi 0, %s27
      %s49 = sphi 0, %s51
      %s52 = sphi 0, %s49
      %s53 = sphi 0, %s52
      %s69 = sphi 0, %s53
    $region4: #{tpu_custom_call.1} parent=1 // loop_header_branch
      %16 = sbr.rel (%p14) target = $region8
    $region5: #{tpu_custom_call.1} parent=1 // loop_body
      %s18 = ssub.s32 %s13, 1
      %s19 = ssub.s32 %s13, 2
      %s20 = sadd.s32 %s13, 1
      %s21 = ssub.s32 %s13, %s20
      %p22 = scmp.eq.s32.totalorder %s21, 0
      %s24 = sadd.s32 %s23, 1
      %s25 = scalar_select %p22, %s23, %s24
      %p28 = pneg %p22
      %p29 = scmp.eq.s32.totalorder %s13, 1
      %p30 = por %p28, %p29
      %p31 = scmp.ne.s32.totalorder %s23, %s26
      %p32 = scmp.eq.s32.totalorder %s13, 0
      %p33 = por %p31, %p32
      %p34 = scmp.ne.s32.totalorder %s23, %s26
      %p35 = scmp.eq.s32.totalorder %s18, 1
      %p36 = por %p34, %p35
      %p37 = scmp.ne.s32.totalorder %s26, %s27
      %p38 = scmp.eq.s32.totalorder %s18, 0
      %p39 = por %p37, %p38
      %p40 = scmp.ne.s32.totalorder %s26, %s27
      %p41 = scmp.eq.s32.totalorder %s19, 1
      %p42 = por %p40, %p41
      %p44 = scmp.ne.s32.totalorder %s27, %s43
      %p45 = scmp.eq.s32.totalorder %s19, 0
      %p46 = por %p44, %p45
      %s47 = ssub.s32 %s13, %s20
      %p48 = scmp.eq.s32.totalorder %s47, 0
      %s50 = sadd.s32 %s49, 1
      %s51 = scalar_select %p48, %s49, %s50
      %p54 = pneg %p48
      %p55 = scmp.eq.s32.totalorder %s13, 1
      %p56 = por %p54, %p55
      %p57 = scmp.ne.s32.totalorder %s49, %s52
      %p58 = scmp.eq.s32.totalorder %s13, 0
      %p59 = por %p57, %p58
      %p60 = scmp.ne.s32.totalorder %s49, %s52
      %p61 = scmp.eq.s32.totalorder %s18, 1
      %p62 = por %p60, %p61
      %p63 = scmp.ne.s32.totalorder %s52, %s53
      %p64 = scmp.eq.s32.totalorder %s18, 0
      %p65 = por %p63, %p64
      %p66 = scmp.ne.s32.totalorder %s52, %s53
      %p67 = scmp.eq.s32.totalorder %s19, 1
      %p68 = por %p66, %p67
      %p70 = scmp.ne.s32.totalorder %s53, %s69
      %p71 = scmp.eq.s32.totalorder %s19, 0
      %p72 = por %p70, %p71
      %p73 = scmp.le.s32.totalorder 1, %s13
      %p74 = scmp.lt.s32.totalorder %s13, 3
      %p75 = pnand %p73, %p74
      %p76 = pneg %p75
      // Predicated region
      $region9: #{tpu_custom_call.1} parent=5 // pred_check
        _
      $region10: #{tpu_custom_call.1} parent=5 // pred_check_branch
        %78 = sbr.rel (%p75) target = $region12
      $region11: #{tpu_custom_call.1} parent=5 // pred_region
        %s79 = ssub.s32 %s13, 1
      $region12: #{tpu_custom_call.1} parent=5 // pred_fallthru
        _
      %p80 = scmp.lt.s32.totalorder %s13, 2
      // Predicated region
      $region13: #{tpu_custom_call.1} parent=5 // pred_check
        %p81 = pneg %p80
      $region14: #{tpu_custom_call.1} parent=5 // pred_check_branch
        %83 = sbr.rel (%p81) target = $region16
      $region15: #{tpu_custom_call.1} parent=5 // pred_region
        // Predicated region
        $region17: #{tpu_custom_call.1} parent=15 // pred_check
          %p84 = pneg %p33
        $region18: #{tpu_custom_call.1} parent=15 // pred_check_branch
          %86 = sbr.rel (%p84) target = $region20
        $region19: #{tpu_custom_call.1} parent=15 // pred_region
          %s87 = sand.u32 %s23, 1
          %s88 = scalar_lea.sflag [#allocation3], %s87
          %s89 = sand.u32 %s23, 1
          %s90 = smul.addr %s89, 8
          %s91 = scalar_lea.vmem [#allocation2], %s90
          %s93 = ssub.s32 128, 128
          %94 = vsyncadd %s88, %s93
          %s95 = smul.addr %s13, 128
          %s96 = scalar_lea.hbm %s0, %s95
          %s98 = sshll.u32 %s91, 4
          %s99 = int_to_ptr.vmem [resolvable:$true] %s98
          %101 = dma.hbm_to_vmem [thread:$0]  %s96, 128, %s99, %s88
        $region20: #{tpu_custom_call.1} parent=15 // pred_fallthru
          _
      $region16: #{tpu_custom_call.1} parent=5 // pred_fallthru
        _
      %p102 = scmp.le.s32.totalorder 1, %s13
      %p103 = scmp.lt.s32.totalorder %s13, 3
      %p104 = pnand %p102, %p103
      %p105 = pneg %p104
      // Predicated region
      $region21: #{tpu_custom_call.1} parent=5 // pred_check
        _
      $region22: #{tpu_custom_call.1} parent=5 // pred_check_branch
        %107 = sbr.rel (%p104) target = $region24
      $region23: #{tpu_custom_call.1} parent=5 // pred_region
        %s108 = ssub.s32 %s13, 1
        %s109 = sand.u32 %s26, 1
        %s110 = scalar_lea.sflag [#allocation3], %s109
        %s111 = sand.u32 %s26, 1
        %s112 = smul.addr %s111, 8
        %s113 = scalar_lea.vmem [#allocation2], %s112
        // Predicated region
        $region25: #{tpu_custom_call.1} parent=23 // pred_check
          %p114 = pneg %p39
        $region26: #{tpu_custom_call.1} parent=23 // pred_check_branch
          %116 = sbr.rel (%p114) target = $region28
        $region27: #{tpu_custom_call.1} parent=23 // pred_region
          %117 = dma.done %s110, 128
        $region28: #{tpu_custom_call.1} parent=23 // pred_fallthru
          _
        %s118 = sand.u32 %s26, 1
        %s119 = scalar_lea.sflag [#allocation3], %s118
        %s120 = sand.u32 %s26, 1
        %s121 = smul.addr %s120, 8
        %s122 = scalar_lea.vmem [#allocation2], %s121
        %p123 = pneg %p39
        %p124 = pneg %p36
        %p125 = pneg %p65
        %p126 = pneg %p62
        %s127 = sand.u32 %s52, 1
        %s128 = scalar_lea.sflag [#allocation4], %s127
        %s129 = sand.u32 %s52, 1
        %s130 = smul.addr %s129, 8
        %s131 = scalar_lea.vmem [#allocation5], %s130
        %v132 = vld [vmem:[%s113] sm:$0xff]
        %v133 = vxor.u32 %v132, 2147483648
        %v134 = vmul.f32 %v133, 1.442695
        %v135 = vpow.pop %v134
        %v136 = vadd.f32 %v135, 1.0
        %v137 = vrcp.pop %v136
        %v138 = vmul.f32 1.0, %v137
        %v139 = vmul.f32 %v138, 4.0
        %v140 = vadd.f32 %v139, -1.0
        %141 = vst [vmem:[%s131] sm:$0xff] %v140
        %s142 = sand.u32 %s52, 1
        %s143 = scalar_lea.sflag [#allocation4], %s142
        %s144 = sand.u32 %s52, 1
        %s145 = smul.addr %s144, 8
        %s146 = scalar_lea.vmem [#allocation5], %s145
        // Predicated region
        $region29: #{tpu_custom_call.1} parent=23 // pred_check
          %p147 = pneg %p62
        $region30: #{tpu_custom_call.1} parent=23 // pred_check_branch
          %149 = sbr.rel (%p147) target = $region32
        $region31: #{tpu_custom_call.1} parent=23 // pred_region
          %s151 = ssub.s32 128, 128
          %152 = vsyncadd %s143, %s151
          %s153 = smul.addr %s18, 128
          %s154 = scalar_lea.hbm %s1, %s153
          %s156 = sshll.u32 %s146, 4
          %s157 = int_to_ptr.vmem [resolvable:$true] %s156
          %159 = dma.vmem_to_hbm [thread:$0]  %s157, 128, %s154, %s143
        $region32: #{tpu_custom_call.1} parent=23 // pred_fallthru
          _
      $region24: #{tpu_custom_call.1} parent=5 // pred_fallthru
        _
      %p160 = scmp.le.s32.totalorder 2, %s13
      // Predicated region
      $region33: #{tpu_custom_call.1} parent=5 // pred_check
        %p161 = pneg %p160
      $region34: #{tpu_custom_call.1} parent=5 // pred_check_branch
        %163 = sbr.rel (%p161) target = $region36
      $region35: #{tpu_custom_call.1} parent=5 // pred_region
        %s164 = ssub.s32 %s13, 2
        // Predicated region
        $region37: #{tpu_custom_call.1} parent=35 // pred_check
          %p165 = pneg %p68
        $region38: #{tpu_custom_call.1} parent=35 // pred_check_branch
          %167 = sbr.rel (%p165) target = $region40
        $region39: #{tpu_custom_call.1} parent=35 // pred_region
          %s168 = sand.u32 %s53, 1
          %s169 = scalar_lea.sflag [#allocation4], %s168
          %s170 = sand.u32 %s53, 1
          %s171 = smul.addr %s170, 8
          %s172 = scalar_lea.vmem [#allocation5], %s171
          %173 = dma.done %s169, 128
        $region40: #{tpu_custom_call.1} parent=35 // pred_fallthru
          _
      $region36: #{tpu_custom_call.1} parent=5 // pred_fallthru
        _
    $region6: #{tpu_custom_call.1} parent=1 // loop_footer
      %s17 = sadd.s32 1, %s13
    $region7: #{tpu_custom_call.1} parent=1 // loop_footer_branch
      %12 = sbr.rel target = $region3
    $region8: #{tpu_custom_call.1} parent=1 // loop_exit
      _
    %174 = vsyncpa [#allocation3], 1
    %s175 = scalar_lea.sflag [#allocation3], 1
    %176 = vsyncpa %s175, 1
    %177 = vsyncpa [#allocation4], 1
    %s178 = scalar_lea.sflag [#allocation4], 1
    %179 = vsyncpa %s178, 1

</llo_original>
